<compile_context>
chip_gen: v5e
topology: v5e:2x2
jax: 0.10.0
libtpu: 0.0.40
codegen_flags: <defaults>
</compile_context>

<pallas_src>
import jax
import jax.numpy as jnp
from jax.experimental import pallas as pl
from jax.experimental.pallas import tpu as pltpu


def mlp_kernel(x_ref,
               w1_ref, b1_ref,
               w2_ref, b2_ref,
               w3_ref, b3_ref,
               w4_ref, b4_ref,
               o_ref):
    # All math in f32; MXU accumulates in f32 via preferred_element_type.
    h = jnp.dot(x_ref[...], w1_ref[...], preferred_element_type=jnp.float32)
    h = jnp.maximum(h + b1_ref[...], 0.0)
    h = jnp.dot(h, w2_ref[...], preferred_element_type=jnp.float32)
    h = jnp.maximum(h + b2_ref[...], 0.0)
    h = jnp.dot(h, w3_ref[...], preferred_element_type=jnp.float32)
    h = jnp.maximum(h + b3_ref[...], 0.0)
    out = jnp.dot(h, w4_ref[...], preferred_element_type=jnp.float32) + b4_ref[...]
    o_ref[...] = out.astype(o_ref.dtype)


def _pick_batch_tile(B, max_tile=8192):
    """Fewest grid steps: full batch if it fits, else the largest multiple-of-8
    divisor of B that is <= max_tile (keeps per-step overhead amortized)."""
    if B <= max_tile:
        return B
    t = (max_tile // 8) * 8
    while t >= 8:
        if B % t == 0:
            return t
        t -= 8
    return B  # fallback: single full block


def ai_model_forward(x, params, *, batch_tile=None):
    """x: [B, D_in] f32; params: w_i [d_in_i, d_out_i] (transposed vs PyTorch), b_i [1, d_out_i]."""
    B, D_in = x.shape
    D_out = params["w4"].shape[1]

    if batch_tile is None:
        batch_tile = _pick_batch_tile(B)
    assert B % batch_tile == 0, "batch must be divisible by batch_tile"
    assert batch_tile % 8 == 0 or batch_tile == B, (
        "batch_tile must be a multiple of 8 sublanes (or the full batch)")

    x = x.astype(jnp.float32)
    w1, b1 = params["w1"].astype(jnp.float32), params["b1"].astype(jnp.float32)
    w2, b2 = params["w2"].astype(jnp.float32), params["b2"].astype(jnp.float32)
    w3, b3 = params["w3"].astype(jnp.float32), params["b3"].astype(jnp.float32)
    w4, b4 = params["w4"].astype(jnp.float32), params["b4"].astype(jnp.float32)

    # Small weights/biases: fully resident in VMEM (no per-step DMA).
    vmem_full = pl.BlockSpec(memory_space=pltpu.MemorySpace.VMEM)
    weight_specs = [vmem_full] * 8

    grid = (B // batch_tile,)

    h1, h2, h3 = w1.shape[1], w2.shape[1], w3.shape[1]
    flops = 2 * B * (D_in * h1 + h1 * h2 + h2 * h3 + h3 * D_out)
    weight_bytes = sum(int(a.size) * a.dtype.itemsize
                       for a in (w1, w2, w3, w4, b1, b2, b3, b4))
    bytes_accessed = B * D_in * 4 + weight_bytes + B * D_out * 4

    out = pl.pallas_call(
        mlp_kernel,
        out_shape=jax.ShapeDtypeStruct((B, D_out), jnp.float32),
        grid_spec=pltpu.PrefetchScalarGridSpec(
            num_scalar_prefetch=0,
            grid=grid,
            in_specs=[pl.BlockSpec((batch_tile, D_in), lambda i: (i, 0))]
                     + weight_specs,
            # D_out (=16) equals the full last dim, so a sub-128 block is legal.
            out_specs=pl.BlockSpec((batch_tile, D_out), lambda i: (i, 0)),
        ),
        compiler_params=pltpu.CompilerParams(
            dimension_semantics=("parallel",)),
        cost_estimate=pl.CostEstimate(
            flops=flops, transcendentals=0, bytes_accessed=bytes_accessed),
    )(x, w1, b1, w2, b2, w3, b3, w4, b4)

    return out


def init_params(key, input_dim, output_dim):
    """Deterministic init mimicking nn.Linear's U(-1/sqrt(fan_in), 1/sqrt(fan_in)).
    Weights stored [d_in, d_out] (transposed vs PyTorch's [out, in])."""
    dims = [(input_dim, 128), (128, 64), (64, 32), (32, output_dim)]
    params = {}
    for idx, (d_in, d_out) in enumerate(dims, start=1):
        key, kw, kb = jax.random.split(key, 3)
        bound = 1.0 / jnp.sqrt(jnp.float32(d_in))
        params[f"w{idx}"] = jax.random.uniform(
            kw, (d_in, d_out), jnp.float32, -bound, bound)
        params[f"b{idx}"] = jax.random.uniform(
            kb, (1, d_out), jnp.float32, -bound, bound)
    return params


def reference_forward(x, params):
    """Pure-JAX f32 reference (same semantics as the PyTorch AIModel)."""
    def lin(h, w, b):
        return jnp.dot(h, w, preferred_element_type=jnp.float32) + b
    h = jnp.maximum(lin(x, params["w1"], params["b1"]), 0.0)
    h = jnp.maximum(lin(h, params["w2"], params["b2"]), 0.0)
    h = jnp.maximum(lin(h, params["w3"], params["b3"]), 0.0)
    return lin(h, params["w4"], params["b4"])


if __name__ == "__main__":
    key = jax.random.PRNGKey(0)
    input_dim, output_dim = 32, 16
    batch = 256  # small demo batch; fits a single grid step (fewest-steps policy)

    k_x, k_p = jax.random.split(key)
    x = jax.random.normal(k_x, (batch, input_dim), jnp.float32)
    params = init_params(k_p, input_dim, output_dim)

    out = ai_model_forward(x, params)
    out = jax.block_until_ready(out)

    ref = reference_forward(x, params)
    assert out.shape == (batch, output_dim)
    assert jnp.allclose(out, ref, atol=1e-2, rtol=1e-2), "mismatch vs reference"

    print("KERNEL_OK")
</pallas_src>

<mosaic_0001>
module attributes {stable_mosaic.version = 11 : i64} {
  func.func @mlp_kernel(%arg0: i32, %arg1: memref<256x32xf32, #tpu.memory_space<vmem>>, %arg2: memref<32x128xf32, #tpu.memory_space<vmem>>, %arg3: memref<1x128xf32, #tpu.memory_space<vmem>>, %arg4: memref<128x64xf32, #tpu.memory_space<vmem>>, %arg5: memref<1x64xf32, #tpu.memory_space<vmem>>, %arg6: memref<64x32xf32, #tpu.memory_space<vmem>>, %arg7: memref<1x32xf32, #tpu.memory_space<vmem>>, %arg8: memref<32x16xf32, #tpu.memory_space<vmem>>, %arg9: memref<1x16xf32, #tpu.memory_space<vmem>>, %arg10: memref<256x16xf32, #tpu.memory_space<vmem>>) attributes {dimension_semantics = [#tpu.dimension_semantics<parallel>], iteration_bounds = array<i64: 1>, scalar_prefetch = 0 : i64, scratch_operands = 0 : i64, tpu.core_type = #tpu.core_type<tc>, window_params = [{transform_indices = @transform_0, window_bounds = array<i64: 256, 32>}, {pipeline_mode = #tpu.pipeline_mode<synchronous>, transform_indices = @transform_1, window_bounds = array<i64: 32, 128>}, {pipeline_mode = #tpu.pipeline_mode<synchronous>, transform_indices = @transform_2, window_bounds = array<i64: 1, 128>}, {pipeline_mode = #tpu.pipeline_mode<synchronous>, transform_indices = @transform_3, window_bounds = array<i64: 128, 64>}, {pipeline_mode = #tpu.pipeline_mode<synchronous>, transform_indices = @transform_4, window_bounds = array<i64: 1, 64>}, {pipeline_mode = #tpu.pipeline_mode<synchronous>, transform_indices = @transform_5, window_bounds = array<i64: 64, 32>}, {pipeline_mode = #tpu.pipeline_mode<synchronous>, transform_indices = @transform_6, window_bounds = array<i64: 1, 32>}, {pipeline_mode = #tpu.pipeline_mode<synchronous>, transform_indices = @transform_7, window_bounds = array<i64: 32, 16>}, {pipeline_mode = #tpu.pipeline_mode<synchronous>, transform_indices = @transform_8, window_bounds = array<i64: 1, 16>}, {transform_indices = @transform_9, window_bounds = array<i64: 256, 16>}]} {
    %c0 = arith.constant 0 : index
    %c0_0 = arith.constant 0 : index
    %0 = vector.load %arg1[%c0, %c0_0] : memref<256x32xf32, #tpu.memory_space<vmem>>, vector<256x32xf32>
    %c0_1 = arith.constant 0 : index
    %c0_2 = arith.constant 0 : index
    %1 = vector.load %arg2[%c0_1, %c0_2] : memref<32x128xf32, #tpu.memory_space<vmem>>, vector<32x128xf32>
    %cst = arith.constant dense<0.000000e+00> : vector<256x128xf32>
    %2 = tpu.matmul %0, %1, %cst {dimension_numbers = #tpu.dot_dimension_numbers<[1], [0], [0], [1], [0, 0, 1, 1], [], []>} : vector<256x32xf32>, vector<32x128xf32>, vector<256x128xf32> -> vector<256x128xf32>
    %c0_3 = arith.constant 0 : index
    %c0_4 = arith.constant 0 : index
    %3 = vector.load %arg3[%c0_3, %c0_4] : memref<1x128xf32, #tpu.memory_space<vmem>>, vector<1x128xf32>
    %4 = vector.broadcast %3 : vector<1x128xf32> to vector<256x128xf32>
    %5 = arith.addf %2, %4 : vector<256x128xf32>
    %cst_5 = arith.constant 0.000000e+00 : f32
    %6 = vector.broadcast %cst_5 : f32 to vector<256x128xf32>
    %7 = arith.maximumf %5, %6 : vector<256x128xf32>
    %c0_6 = arith.constant 0 : index
    %c0_7 = arith.constant 0 : index
    %8 = vector.load %arg4[%c0_6, %c0_7] : memref<128x64xf32, #tpu.memory_space<vmem>>, vector<128x64xf32>
    %cst_8 = arith.constant dense<0.000000e+00> : vector<256x64xf32>
    %9 = tpu.matmul %7, %8, %cst_8 {dimension_numbers = #tpu.dot_dimension_numbers<[1], [0], [0], [1], [0, 0, 1, 1], [], []>} : vector<256x128xf32>, vector<128x64xf32>, vector<256x64xf32> -> vector<256x64xf32>
    %c0_9 = arith.constant 0 : index
    %c0_10 = arith.constant 0 : index
    %10 = vector.load %arg5[%c0_9, %c0_10] : memref<1x64xf32, #tpu.memory_space<vmem>>, vector<1x64xf32>
    %11 = vector.broadcast %10 : vector<1x64xf32> to vector<256x64xf32>
    %12 = arith.addf %9, %11 : vector<256x64xf32>
    %cst_11 = arith.constant 0.000000e+00 : f32
    %13 = vector.broadcast %cst_11 : f32 to vector<256x64xf32>
    %14 = arith.maximumf %12, %13 : vector<256x64xf32>
    %c0_12 = arith.constant 0 : index
    %c0_13 = arith.constant 0 : index
    %15 = vector.load %arg6[%c0_12, %c0_13] : memref<64x32xf32, #tpu.memory_space<vmem>>, vector<64x32xf32>
    %cst_14 = arith.constant dense<0.000000e+00> : vector<256x32xf32>
    %16 = tpu.matmul %14, %15, %cst_14 {dimension_numbers = #tpu.dot_dimension_numbers<[1], [0], [0], [1], [0, 0, 1, 1], [], []>} : vector<256x64xf32>, vector<64x32xf32>, vector<256x32xf32> -> vector<256x32xf32>
    %c0_15 = arith.constant 0 : index
    %c0_16 = arith.constant 0 : index
    %17 = vector.load %arg7[%c0_15, %c0_16] : memref<1x32xf32, #tpu.memory_space<vmem>>, vector<1x32xf32>
    %18 = vector.broadcast %17 : vector<1x32xf32> to vector<256x32xf32>
    %19 = arith.addf %16, %18 : vector<256x32xf32>
    %cst_17 = arith.constant 0.000000e+00 : f32
    %20 = vector.broadcast %cst_17 : f32 to vector<256x32xf32>
    %21 = arith.maximumf %19, %20 : vector<256x32xf32>
    %c0_18 = arith.constant 0 : index
    %c0_19 = arith.constant 0 : index
    %22 = vector.load %arg8[%c0_18, %c0_19] : memref<32x16xf32, #tpu.memory_space<vmem>>, vector<32x16xf32>
    %cst_20 = arith.constant dense<0.000000e+00> : vector<256x16xf32>
    %23 = tpu.matmul %21, %22, %cst_20 {dimension_numbers = #tpu.dot_dimension_numbers<[1], [0], [0], [1], [0, 0, 1, 1], [], []>} : vector<256x32xf32>, vector<32x16xf32>, vector<256x16xf32> -> vector<256x16xf32>
    %c0_21 = arith.constant 0 : index
    %c0_22 = arith.constant 0 : index
    %24 = vector.load %arg9[%c0_21, %c0_22] : memref<1x16xf32, #tpu.memory_space<vmem>>, vector<1x16xf32>
    %25 = vector.broadcast %24 : vector<1x16xf32> to vector<256x16xf32>
    %26 = arith.addf %23, %25 : vector<256x16xf32>
    %c0_23 = arith.constant 0 : index
    %c0_24 = arith.constant 0 : index
    %27 = vector.load %arg10[%c0_23, %c0_24] : memref<256x16xf32, #tpu.memory_space<vmem>>, vector<256x16xf32>
    tpu.vector_store %arg10[%c0_23, %c0_24], %26 {strides = array<i32>} : memref<256x16xf32, #tpu.memory_space<vmem>>, vector<256x16xf32>,
    return
  }
  func.func @transform_0(%arg0: i32) -> (i32, i32) {
    %c0_i32 = arith.constant 0 : i32
    %c0_i32_0 = arith.constant 0 : i32
    return %arg0, %c0_i32 : i32, i32
  }
  func.func @transform_1(%arg0: i32) -> (i32, i32) {
    %c0_i32 = arith.constant 0 : i32
    %c0_i32_0 = arith.constant 0 : i32
    %c0_i32_1 = arith.constant 0 : i32
    return %c0_i32, %c0_i32_0 : i32, i32
  }
  func.func @transform_2(%arg0: i32) -> (i32, i32) {
    %c0_i32 = arith.constant 0 : i32
    %c0_i32_0 = arith.constant 0 : i32
    %c0_i32_1 = arith.constant 0 : i32
    return %c0_i32, %c0_i32_0 : i32, i32
  }
  func.func @transform_3(%arg0: i32) -> (i32, i32) {
    %c0_i32 = arith.constant 0 : i32
    %c0_i32_0 = arith.constant 0 : i32
    %c0_i32_1 = arith.constant 0 : i32
    return %c0_i32, %c0_i32_0 : i32, i32
  }
  func.func @transform_4(%arg0: i32) -> (i32, i32) {
    %c0_i32 = arith.constant 0 : i32
    %c0_i32_0 = arith.constant 0 : i32
    %c0_i32_1 = arith.constant 0 : i32
    return %c0_i32, %c0_i32_0 : i32, i32
  }
  func.func @transform_5(%arg0: i32) -> (i32, i32) {
    %c0_i32 = arith.constant 0 : i32
    %c0_i32_0 = arith.constant 0 : i32
    %c0_i32_1 = arith.constant 0 : i32
    return %c0_i32, %c0_i32_0 : i32, i32
  }
  func.func @transform_6(%arg0: i32) -> (i32, i32) {
    %c0_i32 = arith.constant 0 : i32
    %c0_i32_0 = arith.constant 0 : i32
    %c0_i32_1 = arith.constant 0 : i32
    return %c0_i32, %c0_i32_0 : i32, i32
  }
  func.func @transform_7(%arg0: i32) -> (i32, i32) {
    %c0_i32 = arith.constant 0 : i32
    %c0_i32_0 = arith.constant 0 : i32
    %c0_i32_1 = arith.constant 0 : i32
    return %c0_i32, %c0_i32_0 : i32, i32
  }
  func.func @transform_8(%arg0: i32) -> (i32, i32) {
    %c0_i32 = arith.constant 0 : i32
    %c0_i32_0 = arith.constant 0 : i32
    %c0_i32_1 = arith.constant 0 : i32
    return %c0_i32, %c0_i32_0 : i32, i32
  }
  func.func @transform_9(%arg0: i32) -> (i32, i32) {
    %c0_i32 = arith.constant 0 : i32
    %c0_i32_0 = arith.constant 0 : i32
    return %arg0, %c0_i32 : i32, i32
  }
}

</mosaic_0001>

<llo_original>
// kernel: tpu_custom_call.1
$region0: #{tpu_custom_call.1}
  #allocation0 [shape = 'u32[]', space=smem, size = 0x4, offset = 0x4, fixed_abs, tag = 'smem constant byte address 0x4 - core index']
  #allocation1 [shape = 'u32[72,128]{1,0:T(1,128)}', space=vmem, size = 0x9000, scoped, tag = 'internal scratch']
  %s0 = inlined_call_operand.vmem [shape: f32[256,32], index: 0, kind: input, shape index: {}]
  %s1 = inlined_call_operand.vmem [shape: f32[32,128], index: 1, kind: input, shape index: {}]
  %s2 = inlined_call_operand.vmem [shape: f32[1,128], index: 2, kind: input, shape index: {}]
  %s3 = inlined_call_operand.vmem [shape: f32[128,64], index: 3, kind: input, shape index: {}]
  %s4 = inlined_call_operand.vmem [shape: f32[1,64], index: 4, kind: input, shape index: {}]
  %s5 = inlined_call_operand.vmem [shape: f32[64,32], index: 5, kind: input, shape index: {}]
  %s6 = inlined_call_operand.vmem [shape: f32[1,32], index: 6, kind: input, shape index: {}]
  %s7 = inlined_call_operand.vmem [shape: f32[32,16], index: 7, kind: input, shape index: {}]
  %s8 = inlined_call_operand.vmem [shape: f32[1,16], index: 8, kind: input, shape index: {}]
  %s9 = inlined_call_operand.vmem [shape: f32[256,16], index: 9, kind: output, shape index: {}]
  %s10 = sld [smem:[#allocation0]]
  $region46: #{tpu_custom_call.1} parent=0
    _
  %s12 = ssub.s32 1, %s10
  %s13 = scalar_select 0, %s12, %s10
  // Predicated region
  $region2: #{tpu_custom_call.1} parent=0 // pred_check
    _
  $region3: #{tpu_custom_call.1} parent=0 // pred_check_branch
    %15 = sbr.rel (0) target = $region5
  $region4: #{tpu_custom_call.1} parent=0 // pred_region
    _
  $region5: #{tpu_custom_call.1} parent=0 // pred_fallthru
    _
  // Predicated region
  $region6: #{tpu_custom_call.1} parent=0 // pred_check
    _
  $region7: #{tpu_custom_call.1} parent=0 // pred_check_branch
    %17 = sbr.rel (0) target = $region9
  $region8: #{tpu_custom_call.1} parent=0 // pred_region
    _
  $region9: #{tpu_custom_call.1} parent=0 // pred_fallthru
    _
  // Predicated region
  $region10: #{tpu_custom_call.1} parent=0 // pred_check
    _
  $region11: #{tpu_custom_call.1} parent=0 // pred_check_branch
    %19 = sbr.rel (0) target = $region13
  $region12: #{tpu_custom_call.1} parent=0 // pred_region
    _
  $region13: #{tpu_custom_call.1} parent=0 // pred_fallthru
    _
  // Predicated region
  $region14: #{tpu_custom_call.1} parent=0 // pred_check
    _
  $region15: #{tpu_custom_call.1} parent=0 // pred_check_branch
    %21 = sbr.rel (0) target = $region17
  $region16: #{tpu_custom_call.1} parent=0 // pred_region
    _
  $region17: #{tpu_custom_call.1} parent=0 // pred_fallthru
    _
  // Predicated region
  $region18: #{tpu_custom_call.1} parent=0 // pred_check
    _
  $region19: #{tpu_custom_call.1} parent=0 // pred_check_branch
    %23 = sbr.rel (0) target = $region21
  $region20: #{tpu_custom_call.1} parent=0 // pred_region
    _
  $region21: #{tpu_custom_call.1} parent=0 // pred_fallthru
    _
  // Predicated region
  $region22: #{tpu_custom_call.1} parent=0 // pred_check
    _
  $region23: #{tpu_custom_call.1} parent=0 // pred_check_branch
    %25 = sbr.rel (0) target = $region25
  $region24: #{tpu_custom_call.1} parent=0 // pred_region
    _
  $region25: #{tpu_custom_call.1} parent=0 // pred_fallthru
    _
  // Predicated region
  $region26: #{tpu_custom_call.1} parent=0 // pred_check
    _
  $region27: #{tpu_custom_call.1} parent=0 // pred_check_branch
    %27 = sbr.rel (0) target = $region29
  $region28: #{tpu_custom_call.1} parent=0 // pred_region
    _
  $region29: #{tpu_custom_call.1} parent=0 // pred_fallthru
    _
  // Predicated region
  $region30: #{tpu_custom_call.1} parent=0 // pred_check
    _
  $region31: #{tpu_custom_call.1} parent=0 // pred_check_branch
    %29 = sbr.rel (0) target = $region33
  $region32: #{tpu_custom_call.1} parent=0 // pred_region
    _
  $region33: #{tpu_custom_call.1} parent=0 // pred_fallthru
    _
  // Predicated region
  $region34: #{tpu_custom_call.1} parent=0 // pred_check
    _
  $region35: #{tpu_custom_call.1} parent=0 // pred_check_branch
    %31 = sbr.rel (0) target = $region37
  $region36: #{tpu_custom_call.1} parent=0 // pred_region
    _
  $region37: #{tpu_custom_call.1} parent=0 // pred_fallthru
    _
  %v32 = vld [vmem:[%s0] sm:$0xff]
  %v33 = vld [vmem:[%s0 + $0x8] sm:$0xff]
  %v34 = vld [vmem:[%s0 + $0x10] sm:$0xff]
  %v35 = vld [vmem:[%s0 + $0x18] sm:$0xff]
  %v36 = vld [vmem:[%s0 + $0x20] sm:$0xff]
  %v37 = vld [vmem:[%s0 + $0x28] sm:$0xff]
  %v38 = vld [vmem:[%s0 + $0x30] sm:$0xff]
  %v39 = vld [vmem:[%s0 + $0x38] sm:$0xff]
  %v40 = vld [vmem:[%s0 + $0x40] sm:$0xff]
  %v41 = vld [vmem:[%s0 + $0x48] sm:$0xff]
  %v42 = vld [vmem:[%s0 + $0x50] sm:$0xff]
  %v43 = vld [vmem:[%s0 + $0x58] sm:$0xff]
  %v44 = vld [vmem:[%s0 + $0x60] sm:$0xff]
  %v45 = vld [vmem:[%s0 + $0x68] sm:$0xff]
  %v46 = vld [vmem:[%s0 + $0x70] sm:$0xff]
  %v47 = vld [vmem:[%s0 + $0x78] sm:$0xff]
  %v48 = vld [vmem:[%s0 + $0x80] sm:$0xff]
  %v49 = vld [vmem:[%s0 + $0x88] sm:$0xff]
  %v50 = vld [vmem:[%s0 + $0x90] sm:$0xff]
  %v51 = vld [vmem:[%s0 + $0x98] sm:$0xff]
  %v52 = vld [vmem:[%s0 + $0xa0] sm:$0xff]
  %v53 = vld [vmem:[%s0 + $0xa8] sm:$0xff]
  %v54 = vld [vmem:[%s0 + $0xb0] sm:$0xff]
  %v55 = vld [vmem:[%s0 + $0xb8] sm:$0xff]
  %v56 = vld [vmem:[%s0 + $0xc0] sm:$0xff]
  %v57 = vld [vmem:[%s0 + $0xc8] sm:$0xff]
  %v58 = vld [vmem:[%s0 + $0xd0] sm:$0xff]
  %v59 = vld [vmem:[%s0 + $0xd8] sm:$0xff]
  %v60 = vld [vmem:[%s0 + $0xe0] sm:$0xff]
  %v61 = vld [vmem:[%s0 + $0xe8] sm:$0xff]
  %v62 = vld [vmem:[%s0 + $0xf0] sm:$0xff]
  %v63 = vld [vmem:[%s0 + $0xf8] sm:$0xff]
  %v64 = vld [vmem:[%s1] sm:$0xff]
  %v65 = vld [vmem:[%s1 + $0x8] sm:$0xff]
  %v66 = vld [vmem:[%s1 + $0x10] sm:$0xff]
  %v67 = vld [vmem:[%s1 + $0x18] sm:$0xff]
  %v68 = vld [vmem:[%s2] sm:$0x1]
  %v70 = vperm.slane %v68, 0
  %vm72 = vcmask 261120
  %v74 = vsel %vm72, %v32, 0
  %v77 = vsel %vm72, %v33, 0
  %v80 = vsel %vm72, %v34, 0
  %v83 = vsel %vm72, %v35, 0
  %v86 = vsel %vm72, %v36, 0
  %v89 = vsel %vm72, %v37, 0
  %v92 = vsel %vm72, %v38, 0
  %v95 = vsel %vm72, %v39, 0
  %v98 = vsel %vm72, %v40, 0
  %v101 = vsel %vm72, %v41, 0
  %v104 = vsel %vm72, %v42, 0
  %v107 = vsel %vm72, %v43, 0
  %v110 = vsel %vm72, %v44, 0
  %v113 = vsel %vm72, %v45, 0
  %v116 = vsel %vm72, %v46, 0
  %v119 = vsel %vm72, %v47, 0
  %v122 = vsel %vm72, %v48, 0
  %v125 = vsel %vm72, %v49, 0
  %v128 = vsel %vm72, %v50, 0
  %v131 = vsel %vm72, %v51, 0
  %v134 = vsel %vm72, %v52, 0
  %v137 = vsel %vm72, %v53, 0
  %v140 = vsel %vm72, %v54, 0
  %v143 = vsel %vm72, %v55, 0
  %v146 = vsel %vm72, %v56, 0
  %v149 = vsel %vm72, %v57, 0
  %v152 = vsel %vm72, %v58, 0
  %v155 = vsel %vm72, %v59, 0
  %v158 = vsel %vm72, %v60, 0
  %v161 = vsel %vm72, %v61, 0
  %v164 = vsel %vm72, %v62, 0
  %v167 = vsel %vm72, %v63, 0
  %169 = vmatpush.msra.mxu0 0.0
  %170 = vmatpush.msra.mxu0 0.0
  %171 = vmatpush.msra.mxu0 0.0
  %172 = vmatpush.msra.mxu0 0.0
  %173 = vmatpush.msra.mxu0 0.0
  %174 = vmatpush.msra.mxu0 0.0
  %175 = vmatpush.msra.mxu0 0.0
  %176 = vmatpush.msra.mxu0 0.0
  %177 = vmatpush.msra.mxu0 0.0
  %178 = vmatpush.msra.mxu0 0.0
  %179 = vmatpush.msra.mxu0 0.0
  %180 = vmatpush.msra.mxu0 0.0
  %181 = vmatpush.msra.mxu0 %v67
  %182 = vmatpush.msra.mxu0 %v66
  %183 = vmatpush.msra.mxu0 %v65
  %184 = vmatpush.msra.mxu0 %v64
  %185 = vmatmul.f32.gmra.mxu0 %v74
  %v186 = vpop.f32.mrf.mxu0
  %v187 = vadd.f32 %v70, %v186
  %188 = vmatmul.f32.gmra.mxu0 %v77
  %v189 = vpop.f32.mrf.mxu0
  %v190 = vadd.f32 %v70, %v189
  %191 = vmatmul.f32.gmra.mxu0 %v80
  %v192 = vpop.f32.mrf.mxu0
  %v193 = vadd.f32 %v70, %v192
  %194 = vmatmul.f32.gmra.mxu0 %v83
  %v195 = vpop.f32.mrf.mxu0
  %v196 = vadd.f32 %v70, %v195
  %197 = vmatmul.f32.gmra.mxu0 %v86
  %v198 = vpop.f32.mrf.mxu0
  %v199 = vadd.f32 %v70, %v198
  %200 = vmatmul.f32.gmra.mxu0 %v89
  %v201 = vpop.f32.mrf.mxu0
  %v202 = vadd.f32 %v70, %v201
  %203 = vmatmul.f32.gmra.mxu0 %v92
  %v204 = vpop.f32.mrf.mxu0
  %v205 = vadd.f32 %v70, %v204
  %206 = vmatmul.f32.gmra.mxu0 %v95
  %v207 = vpop.f32.mrf.mxu0
  %v208 = vadd.f32 %v70, %v207
  %209 = vmatmul.f32.gmra.mxu0 %v98
  %v210 = vpop.f32.mrf.mxu0
  %v211 = vadd.f32 %v70, %v210
  %212 = vmatmul.f32.gmra.mxu0 %v101
  %v213 = vpop.f32.mrf.mxu0
  %v214 = vadd.f32 %v70, %v213
  %215 = vmatmul.f32.gmra.mxu0 %v104
  %v216 = vpop.f32.mrf.mxu0
  %v217 = vadd.f32 %v70, %v216
  %218 = vmatmul.f32.gmra.mxu0 %v107
  %v219 = vpop.f32.mrf.mxu0
  %v220 = vadd.f32 %v70, %v219
  %221 = vmatmul.f32.gmra.mxu0 %v110
  %v222 = vpop.f32.mrf.mxu0
  %v223 = vadd.f32 %v70, %v222
  %224 = vmatmul.f32.gmra.mxu0 %v113
  %v225 = vpop.f32.mrf.mxu0
  %v226 = vadd.f32 %v70, %v225
  %227 = vmatmul.f32.gmra.mxu0 %v116
  %v228 = vpop.f32.mrf.mxu0
  %v229 = vadd.f32 %v70, %v228
  %230 = vmatmul.f32.gmra.mxu0 %v119
  %v231 = vpop.f32.mrf.mxu0
  %v232 = vadd.f32 %v70, %v231
  %233 = vmatmul.f32.gmra.mxu0 %v122
  %v234 = vpop.f32.mrf.mxu0
  %v235 = vadd.f32 %v70, %v234
  %236 = vmatmul.f32.gmra.mxu0 %v125
  %v237 = vpop.f32.mrf.mxu0
  %v238 = vadd.f32 %v70, %v237
  %239 = vmatmul.f32.gmra.mxu0 %v128
  %v240 = vpop.f32.mrf.mxu0
  %v241 = vadd.f32 %v70, %v240
  %242 = vmatmul.f32.gmra.mxu0 %v131
  %v243 = vpop.f32.mrf.mxu0
  %v244 = vadd.f32 %v70, %v243
  %245 = vmatmul.f32.gmra.mxu0 %v134
  %v246 = vpop.f32.mrf.mxu0
  %v247 = vadd.f32 %v70, %v246
  %248 = vmatmul.f32.gmra.mxu0 %v137
  %v249 = vpop.f32.mrf.mxu0
  %v250 = vadd.f32 %v70, %v249
  %251 = vmatmul.f32.gmra.mxu0 %v140
  %v252 = vpop.f32.mrf.mxu0
  %v253 = vadd.f32 %v70, %v252
  %254 = vmatmul.f32.gmra.mxu0 %v143
  %v255 = vpop.f32.mrf.mxu0
  %v256 = vadd.f32 %v70, %v255
  %257 = vmatmul.f32.gmra.mxu0 %v146
  %v258 = vpop.f32.mrf.mxu0
  %v259 = vadd.f32 %v70, %v258
  %260 = vmatmul.f32.gmra.mxu0 %v149
  %v261 = vpop.f32.mrf.mxu0
  %v262 = vadd.f32 %v70, %v261
  %263 = vmatmul.f32.gmra.mxu0 %v152
  %v264 = vpop.f32.mrf.mxu0
  %v265 = vadd.f32 %v70, %v264
  %266 = vmatmul.f32.gmra.mxu0 %v155
  %v267 = vpop.f32.mrf.mxu0
  %v268 = vadd.f32 %v70, %v267
  %269 = vmatmul.f32.gmra.mxu0 %v158
  %v270 = vpop.f32.mrf.mxu0
  %v271 = vadd.f32 %v70, %v270
  %272 = vmatmul.f32.gmra.mxu0 %v161
  %v273 = vpop.f32.mrf.mxu0
  %v274 = vadd.f32 %v70, %v273
  %275 = vmatmul.f32.gmra.mxu0 %v164
  %v276 = vpop.f32.mrf.mxu0
  %v277 = vadd.f32 %v70, %v276
  %278 = vmatmul.f32.gmra.mxu0 %v167
  %v279 = vpop.f32.mrf.mxu0
  %v280 = vadd.f32 %v70, %v279
  %281 = vdwg.mxu0
  %v282 = vmax.f32 %v187, 0.0
  %v283 = vmax.f32 %v190, 0.0
  %v284 = vmax.f32 %v193, 0.0
  %v285 = vmax.f32 %v196, 0.0
  %v286 = vmax.f32 %v199, 0.0
  %v287 = vmax.f32 %v202, 0.0
  %v288 = vmax.f32 %v205, 0.0
  %v289 = vmax.f32 %v208, 0.0
  %v290 = vmax.f32 %v211, 0.0
  %v291 = vmax.f32 %v214, 0.0
  %v292 = vmax.f32 %v217, 0.0
  %v293 = vmax.f32 %v220, 0.0
  %v294 = vmax.f32 %v223, 0.0
  %v295 = vmax.f32 %v226, 0.0
  %v296 = vmax.f32 %v229, 0.0
  %v297 = vmax.f32 %v232, 0.0
  %v298 = vmax.f32 %v235, 0.0
  %v299 = vmax.f32 %v238, 0.0
  %v300 = vmax.f32 %v241, 0.0
  %v301 = vmax.f32 %v244, 0.0
  %v302 = vmax.f32 %v247, 0.0
  %v303 = vmax.f32 %v250, 0.0
  %v304 = vmax.f32 %v253, 0.0
  %v305 = vmax.f32 %v256, 0.0
  %v306 = vmax.f32 %v259, 0.0
  %v307 = vmax.f32 %v262, 0.0
  %v308 = vmax.f32 %v265, 0.0
  %v309 = vmax.f32 %v268, 0.0
  %v310 = vmax.f32 %v271, 0.0
  %v311 = vmax.f32 %v274, 0.0
  %v312 = vmax.f32 %v277, 0.0
  %v313 = vmax.f32 %v280, 0.0
  %v314 = vld [vmem:[%s3] sm:$0xff]
  %v315 = vld [vmem:[%s3 + $0x8] sm:$0xff]
  %v316 = vld [vmem:[%s3 + $0x10] sm:$0xff]
  %v317 = vld [vmem:[%s3 + $0x18] sm:$0xff]
  %v318 = vld [vmem:[%s3 + $0x20] sm:$0xff]
  %v319 = vld [vmem:[%s3 + $0x28] sm:$0xff]
  %v320 = vld [vmem:[%s3 + $0x30] sm:$0xff]
  %v321 = vld [vmem:[%s3 + $0x38] sm:$0xff]
  %v322 = vld [vmem:[%s3 + $0x40] sm:$0xff]
  %v323 = vld [vmem:[%s3 + $0x48] sm:$0xff]
  %v324 = vld [vmem:[%s3 + $0x50] sm:$0xff]
  %v325 = vld [vmem:[%s3 + $0x58] sm:$0xff]
  %v326 = vld [vmem:[%s3 + $0x60] sm:$0xff]
  %v327 = vld [vmem:[%s3 + $0x68] sm:$0xff]
  %v328 = vld [vmem:[%s3 + $0x70] sm:$0xff]
  %v329 = vld [vmem:[%s3 + $0x78] sm:$0xff]
  %v330 = vld [vmem:[%s4] sm:$0x1]
  %v332 = vperm.slane %v330, 0
  %334 = vmatpush.msra.mxu0 %v329
  %335 = vmatpush.msra.mxu0 %v328
  %336 = vmatpush.msra.mxu0 %v327
  %337 = vmatpush.msra.mxu0 %v326
  %338 = vmatpush.msra.mxu0 %v325
  %339 = vmatpush.msra.mxu0 %v324
  %340 = vmatpush.msra.mxu0 %v323
  %341 = vmatpush.msra.mxu0 %v322
  %342 = vmatpush.msra.mxu0 %v321
  %343 = vmatpush.msra.mxu0 %v320
  %344 = vmatpush.msra.mxu0 %v319
  %345 = vmatpush.msra.mxu0 %v318
  %346 = vmatpush.msra.mxu0 %v317
  %347 = vmatpush.msra.mxu0 %v316
  %348 = vmatpush.msra.mxu0 %v315
  %349 = vmatpush.msra.mxu0 %v314
  %350 = vmatmul.f32.gmra.mxu0 %v282
  %v351 = vpop.f32.mrf.mxu0
  %v352 = vadd.f32 %v332, %v351
  %353 = vmatmul.f32.gmra.mxu0 %v283
  %v354 = vpop.f32.mrf.mxu0
  %v355 = vadd.f32 %v332, %v354
  %356 = vmatmul.f32.gmra.mxu0 %v284
  %v357 = vpop.f32.mrf.mxu0
  %v358 = vadd.f32 %v332, %v357
  %359 = vmatmul.f32.gmra.mxu0 %v285
  %v360 = vpop.f32.mrf.mxu0
  %v361 = vadd.f32 %v332, %v360
  %362 = vmatmul.f32.gmra.mxu0 %v286
  %v363 = vpop.f32.mrf.mxu0
  %v364 = vadd.f32 %v332, %v363
  %365 = vmatmul.f32.gmra.mxu0 %v287
  %v366 = vpop.f32.mrf.mxu0
  %v367 = vadd.f32 %v332, %v366
  %368 = vmatmul.f32.gmra.mxu0 %v288
  %v369 = vpop.f32.mrf.mxu0
  %v370 = vadd.f32 %v332, %v369
  %371 = vmatmul.f32.gmra.mxu0 %v289
  %v372 = vpop.f32.mrf.mxu0
  %v373 = vadd.f32 %v332, %v372
  %374 = vmatmul.f32.gmra.mxu0 %v290
  %v375 = vpop.f32.mrf.mxu0
  %v376 = vadd.f32 %v332, %v375
  %377 = vmatmul.f32.gmra.mxu0 %v291
  %v378 = vpop.f32.mrf.mxu0
  %v379 = vadd.f32 %v332, %v378
  %380 = vmatmul.f32.gmra.mxu0 %v292
  %v381 = vpop.f32.mrf.mxu0
  %v382 = vadd.f32 %v332, %v381
  %383 = vmatmul.f32.gmra.mxu0 %v293
  %v384 = vpop.f32.mrf.mxu0
  %v385 = vadd.f32 %v332, %v384
  %386 = vmatmul.f32.gmra.mxu0 %v294
  %v387 = vpop.f32.mrf.mxu0
  %v388 = vadd.f32 %v332, %v387
  %389 = vmatmul.f32.gmra.mxu0 %v295
  %v390 = vpop.f32.mrf.mxu0
  %v391 = vadd.f32 %v332, %v390
  %392 = vmatmul.f32.gmra.mxu0 %v296
  %v393 = vpop.f32.mrf.mxu0
  %v394 = vadd.f32 %v332, %v393
  %395 = vmatmul.f32.gmra.mxu0 %v297
  %v396 = vpop.f32.mrf.mxu0
  %v397 = vadd.f32 %v332, %v396
  %398 = vmatmul.f32.gmra.mxu0 %v298
  %v399 = vpop.f32.mrf.mxu0
  %v400 = vadd.f32 %v332, %v399
  %401 = vmatmul.f32.gmra.mxu0 %v299
  %v402 = vpop.f32.mrf.mxu0
  %v403 = vadd.f32 %v332, %v402
  %404 = vmatmul.f32.gmra.mxu0 %v300
  %v405 = vpop.f32.mrf.mxu0
  %v406 = vadd.f32 %v332, %v405
  %407 = vmatmul.f32.gmra.mxu0 %v301
  %v408 = vpop.f32.mrf.mxu0
  %v409 = vadd.f32 %v332, %v408
  %410 = vmatmul.f32.gmra.mxu0 %v302
  %v411 = vpop.f32.mrf.mxu0
  %v412 = vadd.f32 %v332, %v411
  %413 = vmatmul.f32.gmra.mxu0 %v303
  %v414 = vpop.f32.mrf.mxu0
  %v415 = vadd.f32 %v332, %v414
  %416 = vmatmul.f32.gmra.mxu0 %v304
  %v417 = vpop.f32.mrf.mxu0
  %v418 = vadd.f32 %v332, %v417
  %419 = vmatmul.f32.gmra.mxu0 %v305
  %v420 = vpop.f32.mrf.mxu0
  %v421 = vadd.f32 %v332, %v420
  %422 = vmatmul.f32.gmra.mxu0 %v306
  %v423 = vpop.f32.mrf.mxu0
  %v424 = vadd.f32 %v332, %v423
  %425 = vmatmul.f32.gmra.mxu0 %v307
  %v426 = vpop.f32.mrf.mxu0
  %v427 = vadd.f32 %v332, %v426
  %428 = vmatmul.f32.gmra.mxu0 %v308
  %v429 = vpop.f32.mrf.mxu0
  %v430 = vadd.f32 %v332, %v429
  %431 = vmatmul.f32.gmra.mxu0 %v309
  %v432 = vpop.f32.mrf.mxu0
  %v433 = vadd.f32 %v332, %v432
  %434 = vmatmul.f32.gmra.mxu0 %v310
  %v435 = vpop.f32.mrf.mxu0
  %v436 = vadd.f32 %v332, %v435
  %437 = vmatmul.f32.gmra.mxu0 %v311
  %v438 = vpop.f32.mrf.mxu0
  %v439 = vadd.f32 %v332, %v438
  %440 = vmatmul.f32.gmra.mxu0 %v312
  %v441 = vpop.f32.mrf.mxu0
  %v442 = vadd.f32 %v332, %v441
  %443 = vmatmul.f32.gmra.mxu0 %v313
  %v444 = vpop.f32.mrf.mxu0
  %v445 = vadd.f32 %v332, %v444
  %446 = vdwg.mxu0
  %v447 = vmax.f32 %v352, 0.0
  %v448 = vmax.f32 %v355, 0.0
  %v449 = vmax.f32 %v358, 0.0
  %v450 = vmax.f32 %v361, 0.0
  %v451 = vmax.f32 %v364, 0.0
  %v452 = vmax.f32 %v367, 0.0
  %v453 = vmax.f32 %v370, 0.0
  %v454 = vmax.f32 %v373, 0.0
  %v455 = vmax.f32 %v376, 0.0
  %v456 = vmax.f32 %v379, 0.0
  %v457 = vmax.f32 %v382, 0.0
  %v458 = vmax.f32 %v385, 0.0
  %v459 = vmax.f32 %v388, 0.0
  %v460 = vmax.f32 %v391, 0.0
  %v461 = vmax.f32 %v394, 0.0
  %v462 = vmax.f32 %v397, 0.0
  %v463 = vmax.f32 %v400, 0.0
  %v464 = vmax.f32 %v403, 0.0
  %v465 = vmax.f32 %v406, 0.0
  %v466 = vmax.f32 %v409, 0.0
  %v467 = vmax.f32 %v412, 0.0
  %v468 = vmax.f32 %v415, 0.0
  %v469 = vmax.f32 %v418, 0.0
  %v470 = vmax.f32 %v421, 0.0
  %v471 = vmax.f32 %v424, 0.0
  %v472 = vmax.f32 %v427, 0.0
  %v473 = vmax.f32 %v430, 0.0
  %v474 = vmax.f32 %v433, 0.0
  %v475 = vmax.f32 %v436, 0.0
  %v476 = vmax.f32 %v439, 0.0
  %v477 = vmax.f32 %v442, 0.0
  %v478 = vmax.f32 %v445, 0.0
  %v479 = vld [vmem:[%s5] sm:$0xff]
  %v480 = vld [vmem:[%s5 + $0x8] sm:$0xff]
  %v481 = vld [vmem:[%s5 + $0x10] sm:$0xff]
  %v482 = vld [vmem:[%s5 + $0x18] sm:$0xff]
  %v483 = vld [vmem:[%s5 + $0x20] sm:$0xff]
  %v484 = vld [vmem:[%s5 + $0x28] sm:$0xff]
  %v485 = vld [vmem:[%s5 + $0x30] sm:$0xff]
  %v486 = vld [vmem:[%s5 + $0x38] sm:$0xff]
  %v487 = vld [vmem:[%s6] sm:$0x1]
  %v489 = vperm.slane %v487, 0
  %vm491 = vcmask 523264
  %v493 = vsel %vm491, %v447, 0
  %v496 = vsel %vm491, %v448, 0
  %v499 = vsel %vm491, %v449, 0
  %v502 = vsel %vm491, %v450, 0
  %v505 = vsel %vm491, %v451, 0
  %v508 = vsel %vm491, %v452, 0
  %v511 = vsel %vm491, %v453, 0
  %v514 = vsel %vm491, %v454, 0
  %v517 = vsel %vm491, %v455, 0
  %v520 = vsel %vm491, %v456, 0
  %v523 = vsel %vm491, %v457, 0
  %v526 = vsel %vm491, %v458, 0
  %v529 = vsel %vm491, %v459, 0
  %v532 = vsel %vm491, %v460, 0
  %v535 = vsel %vm491, %v461, 0
  %v538 = vsel %vm491, %v462, 0
  %v541 = vsel %vm491, %v463, 0
  %v544 = vsel %vm491, %v464, 0
  %v547 = vsel %vm491, %v465, 0
  %v550 = vsel %vm491, %v466, 0
  %v553 = vsel %vm491, %v467, 0
  %v556 = vsel %vm491, %v468, 0
  %v559 = vsel %vm491, %v469, 0
  %v562 = vsel %vm491, %v470, 0
  %v565 = vsel %vm491, %v471, 0
  %v568 = vsel %vm491, %v472, 0
  %v571 = vsel %vm491, %v473, 0
  %v574 = vsel %vm491, %v474, 0
  %v577 = vsel %vm491, %v475, 0
  %v580 = vsel %vm491, %v476, 0
  %v583 = vsel %vm491, %v477, 0
  %v586 = vsel %vm491, %v478, 0
  %588 = vmatpush.msra.mxu0 0.0
  %589 = vmatpush.msra.mxu0 0.0
  %590 = vmatpush.msra.mxu0 0.0
  %591 = vmatpush.msra.mxu0 0.0
  %592 = vmatpush.msra.mxu0 0.0
  %593 = vmatpush.msra.mxu0 0.0
  %594 = vmatpush.msra.mxu0 0.0
  %595 = vmatpush.msra.mxu0 0.0
  %596 = vmatpush.msra.mxu0 %v486
  %597 = vmatpush.msra.mxu0 %v485
  %598 = vmatpush.msra.mxu0 %v484
  %599 = vmatpush.msra.mxu0 %v483
  %600 = vmatpush.msra.mxu0 %v482
  %601 = vmatpush.msra.mxu0 %v481
  %602 = vmatpush.msra.mxu0 %v480
  %603 = vmatpush.msra.mxu0 %v479
  %604 = vmatmul.f32.gmra.mxu0 %v493
  %v605 = vpop.f32.mrf.mxu0
  %v606 = vadd.f32 %v489, %v605
  %607 = vmatmul.f32.gmra.mxu0 %v496
  %v608 = vpop.f32.mrf.mxu0
  %v609 = vadd.f32 %v489, %v608
  %610 = vmatmul.f32.gmra.mxu0 %v499
  %v611 = vpop.f32.mrf.mxu0
  %v612 = vadd.f32 %v489, %v611
  %613 = vmatmul.f32.gmra.mxu0 %v502
  %v614 = vpop.f32.mrf.mxu0
  %v615 = vadd.f32 %v489, %v614
  %616 = vmatmul.f32.gmra.mxu0 %v505
  %v617 = vpop.f32.mrf.mxu0
  %v618 = vadd.f32 %v489, %v617
  %619 = vmatmul.f32.gmra.mxu0 %v508
  %v620 = vpop.f32.mrf.mxu0
  %v621 = vadd.f32 %v489, %v620
  %622 = vmatmul.f32.gmra.mxu0 %v511
  %v623 = vpop.f32.mrf.mxu0
  %v624 = vadd.f32 %v489, %v623
  %625 = vmatmul.f32.gmra.mxu0 %v514
  %v626 = vpop.f32.mrf.mxu0
  %v627 = vadd.f32 %v489, %v626
  %628 = vmatmul.f32.gmra.mxu0 %v517
  %v629 = vpop.f32.mrf.mxu0
  %v630 = vadd.f32 %v489, %v629
  %631 = vmatmul.f32.gmra.mxu0 %v520
  %v632 = vpop.f32.mrf.mxu0
  %v633 = vadd.f32 %v489, %v632
  %634 = vmatmul.f32.gmra.mxu0 %v523
  %v635 = vpop.f32.mrf.mxu0
  %v636 = vadd.f32 %v489, %v635
  %637 = vmatmul.f32.gmra.mxu0 %v526
  %v638 = vpop.f32.mrf.mxu0
  %v639 = vadd.f32 %v489, %v638
  %640 = vmatmul.f32.gmra.mxu0 %v529
  %v641 = vpop.f32.mrf.mxu0
  %v642 = vadd.f32 %v489, %v641
  %643 = vmatmul.f32.gmra.mxu0 %v532
  %v644 = vpop.f32.mrf.mxu0
  %v645 = vadd.f32 %v489, %v644
  %646 = vmatmul.f32.gmra.mxu0 %v535
  %v647 = vpop.f32.mrf.mxu0
  %v648 = vadd.f32 %v489, %v647
  %649 = vmatmul.f32.gmra.mxu0 %v538
  %v650 = vpop.f32.mrf.mxu0
  %v651 = vadd.f32 %v489, %v650
  %652 = vmatmul.f32.gmra.mxu0 %v541
  %v653 = vpop.f32.mrf.mxu0
  %v654 = vadd.f32 %v489, %v653
  %655 = vmatmul.f32.gmra.mxu0 %v544
  %v656 = vpop.f32.mrf.mxu0
  %v657 = vadd.f32 %v489, %v656
  %658 = vmatmul.f32.gmra.mxu0 %v547
  %v659 = vpop.f32.mrf.mxu0
  %v660 = vadd.f32 %v489, %v659
  %661 = vmatmul.f32.gmra.mxu0 %v550
  %v662 = vpop.f32.mrf.mxu0
  %v663 = vadd.f32 %v489, %v662
  %664 = vmatmul.f32.gmra.mxu0 %v553
  %v665 = vpop.f32.mrf.mxu0
  %v666 = vadd.f32 %v489, %v665
  %667 = vmatmul.f32.gmra.mxu0 %v556
  %v668 = vpop.f32.mrf.mxu0
  %v669 = vadd.f32 %v489, %v668
  %670 = vmatmul.f32.gmra.mxu0 %v559
  %v671 = vpop.f32.mrf.mxu0
  %v672 = vadd.f32 %v489, %v671
  %673 = vmatmul.f32.gmra.mxu0 %v562
  %v674 = vpop.f32.mrf.mxu0
  %v675 = vadd.f32 %v489, %v674
  %676 = vmatmul.f32.gmra.mxu0 %v565
  %v677 = vpop.f32.mrf.mxu0
  %v678 = vadd.f32 %v489, %v677
  %679 = vmatmul.f32.gmra.mxu0 %v568
  %v680 = vpop.f32.mrf.mxu0
  %v681 = vadd.f32 %v489, %v680
  %682 = vmatmul.f32.gmra.mxu0 %v571
  %v683 = vpop.f32.mrf.mxu0
  %v684 = vadd.f32 %v489, %v683
  %685 = vmatmul.f32.gmra.mxu0 %v574
  %v686 = vpop.f32.mrf.mxu0
  %v687 = vadd.f32 %v489, %v686
  %688 = vmatmul.f32.gmra.mxu0 %v577
  %v689 = vpop.f32.mrf.mxu0
  %v690 = vadd.f32 %v489, %v689
  %691 = vmatmul.f32.gmra.mxu0 %v580
  %v692 = vpop.f32.mrf.mxu0
  %v693 = vadd.f32 %v489, %v692
  %694 = vmatmul.f32.gmra.mxu0 %v583
  %v695 = vpop.f32.mrf.mxu0
  %v696 = vadd.f32 %v489, %v695
  %697 = vmatmul.f32.gmra.mxu0 %v586
  %v698 = vpop.f32.mrf.mxu0
  %v699 = vadd.f32 %v489, %v698
  %700 = vdwg.mxu0
  %v701 = vmax.f32 %v606, 0.0
  %v702 = vmax.f32 %v609, 0.0
  %v703 = vmax.f32 %v612, 0.0
  %v704 = vmax.f32 %v615, 0.0
  %v705 = vmax.f32 %v618, 0.0
  %v706 = vmax.f32 %v621, 0.0
  %v707 = vmax.f32 %v624, 0.0
  %v708 = vmax.f32 %v627, 0.0
  %v709 = vmax.f32 %v630, 0.0
  %v710 = vmax.f32 %v633, 0.0
  %v711 = vmax.f32 %v636, 0.0
  %v712 = vmax.f32 %v639, 0.0
  %v713 = vmax.f32 %v642, 0.0
  %v714 = vmax.f32 %v645, 0.0
  %v715 = vmax.f32 %v648, 0.0
  %v716 = vmax.f32 %v651, 0.0
  %v717 = vmax.f32 %v654, 0.0
  %v718 = vmax.f32 %v657, 0.0
  %v719 = vmax.f32 %v660, 0.0
  %v720 = vmax.f32 %v663, 0.0
  %v721 = vmax.f32 %v666, 0.0
  %v722 = vmax.f32 %v669, 0.0
  %v723 = vmax.f32 %v672, 0.0
  %v724 = vmax.f32 %v675, 0.0
  %v725 = vmax.f32 %v678, 0.0
  %v726 = vmax.f32 %v681, 0.0
  %v727 = vmax.f32 %v684, 0.0
  %v728 = vmax.f32 %v687, 0.0
  %v729 = vmax.f32 %v690, 0.0
  %v730 = vmax.f32 %v693, 0.0
  %v731 = vmax.f32 %v696, 0.0
  %v732 = vmax.f32 %v699, 0.0
  %v733 = vld [vmem:[%s7] sm:$0xff]
  %v734 = vld [vmem:[%s7 + $0x8] sm:$0xff]
  %v735 = vld [vmem:[%s7 + $0x10] sm:$0xff]
  %v736 = vld [vmem:[%s7 + $0x18] sm:$0xff]
  %v737 = vld [vmem:[%s8] sm:$0x1]
  %v739 = vperm.slane %v737, 0
  %v742 = vsel %vm72, %v701, 0
  %v745 = vsel %vm72, %v702, 0
  %v748 = vsel %vm72, %v703, 0
  %v751 = vsel %vm72, %v704, 0
  %v754 = vsel %vm72, %v705, 0
  %v757 = vsel %vm72, %v706, 0
  %v760 = vsel %vm72, %v707, 0
  %v763 = vsel %vm72, %v708, 0
  %v766 = vsel %vm72, %v709, 0
  %v769 = vsel %vm72, %v710, 0
  %v772 = vsel %vm72, %v711, 0
  %v775 = vsel %vm72, %v712, 0
  %v778 = vsel %vm72, %v713, 0
  %v781 = vsel %vm72, %v714, 0
  %v784 = vsel %vm72, %v715, 0
  %v787 = vsel %vm72, %v716, 0
  %v790 = vsel %vm72, %v717, 0
  %v793 = vsel %vm72, %v718, 0
  %v796 = vsel %vm72, %v719, 0
  %v799 = vsel %vm72, %v720, 0
  %v802 = vsel %vm72, %v721, 0
  %v805 = vsel %vm72, %v722, 0
  %v808 = vsel %vm72, %v723, 0
  %v811 = vsel %vm72, %v724, 0
  %v814 = vsel %vm72, %v725, 0
  %v817 = vsel %vm72, %v726, 0
  %v820 = vsel %vm72, %v727, 0
  %v823 = vsel %vm72, %v728, 0
  %v826 = vsel %vm72, %v729, 0
  %v829 = vsel %vm72, %v730, 0
  %v832 = vsel %vm72, %v731, 0
  %v835 = vsel %vm72, %v732, 0
  %837 = vmatpush.msra.mxu0 0.0
  %838 = vmatpush.msra.mxu0 0.0
  %839 = vmatpush.msra.mxu0 0.0
  %840 = vmatpush.msra.mxu0 0.0
  %841 = vmatpush.msra.mxu0 0.0
  %842 = vmatpush.msra.mxu0 0.0
  %843 = vmatpush.msra.mxu0 0.0
  %844 = vmatpush.msra.mxu0 0.0
  %845 = vmatpush.msra.mxu0 0.0
  %846 = vmatpush.msra.mxu0 0.0
  %847 = vmatpush.msra.mxu0 0.0
  %848 = vmatpush.msra.mxu0 0.0
  %849 = vmatpush.msra.mxu0 %v736
  %850 = vmatpush.msra.mxu0 %v735
  %851 = vmatpush.msra.mxu0 %v734
  %852 = vmatpush.msra.mxu0 %v733
  %853 = vmatmul.f32.gmra.mxu0 %v742
  %v854 = vpop.f32.mrf.mxu0
  %v855 = vadd.f32 %v739, %v854
  %856 = vmatmul.f32.gmra.mxu0 %v745
  %v857 = vpop.f32.mrf.mxu0
  %v858 = vadd.f32 %v739, %v857
  %859 = vmatmul.f32.gmra.mxu0 %v748
  %v860 = vpop.f32.mrf.mxu0
  %v861 = vadd.f32 %v739, %v860
  %862 = vmatmul.f32.gmra.mxu0 %v751
  %v863 = vpop.f32.mrf.mxu0
  %v864 = vadd.f32 %v739, %v863
  %865 = vmatmul.f32.gmra.mxu0 %v754
  %v866 = vpop.f32.mrf.mxu0
  %v867 = vadd.f32 %v739, %v866
  %868 = vmatmul.f32.gmra.mxu0 %v757
  %v869 = vpop.f32.mrf.mxu0
  %v870 = vadd.f32 %v739, %v869
  %871 = vmatmul.f32.gmra.mxu0 %v760
  %v872 = vpop.f32.mrf.mxu0
  %v873 = vadd.f32 %v739, %v872
  %874 = vmatmul.f32.gmra.mxu0 %v763
  %v875 = vpop.f32.mrf.mxu0
  %v876 = vadd.f32 %v739, %v875
  %877 = vmatmul.f32.gmra.mxu0 %v766
  %v878 = vpop.f32.mrf.mxu0
  %v879 = vadd.f32 %v739, %v878
  %880 = vmatmul.f32.gmra.mxu0 %v769
  %v881 = vpop.f32.mrf.mxu0
  %v882 = vadd.f32 %v739, %v881
  %883 = vmatmul.f32.gmra.mxu0 %v772
  %v884 = vpop.f32.mrf.mxu0
  %v885 = vadd.f32 %v739, %v884
  %886 = vmatmul.f32.gmra.mxu0 %v775
  %v887 = vpop.f32.mrf.mxu0
  %v888 = vadd.f32 %v739, %v887
  %889 = vmatmul.f32.gmra.mxu0 %v778
  %v890 = vpop.f32.mrf.mxu0
  %v891 = vadd.f32 %v739, %v890
  %892 = vmatmul.f32.gmra.mxu0 %v781
  %v893 = vpop.f32.mrf.mxu0
  %v894 = vadd.f32 %v739, %v893
  %895 = vmatmul.f32.gmra.mxu0 %v784
  %v896 = vpop.f32.mrf.mxu0
  %v897 = vadd.f32 %v739, %v896
  %898 = vmatmul.f32.gmra.mxu0 %v787
  %v899 = vpop.f32.mrf.mxu0
  %v900 = vadd.f32 %v739, %v899
  %901 = vmatmul.f32.gmra.mxu0 %v790
  %v902 = vpop.f32.mrf.mxu0
  %v903 = vadd.f32 %v739, %v902
  %904 = vmatmul.f32.gmra.mxu0 %v793
  %v905 = vpop.f32.mrf.mxu0
  %v906 = vadd.f32 %v739, %v905
  %907 = vmatmul.f32.gmra.mxu0 %v796
  %v908 = vpop.f32.mrf.mxu0
  %v909 = vadd.f32 %v739, %v908
  %910 = vmatmul.f32.gmra.mxu0 %v799
  %v911 = vpop.f32.mrf.mxu0
  %v912 = vadd.f32 %v739, %v911
  %913 = vmatmul.f32.gmra.mxu0 %v802
  %v914 = vpop.f32.mrf.mxu0
  %v915 = vadd.f32 %v739, %v914
  %916 = vmatmul.f32.gmra.mxu0 %v805
  %v917 = vpop.f32.mrf.mxu0
  %v918 = vadd.f32 %v739, %v917
  %919 = vmatmul.f32.gmra.mxu0 %v808
  %v920 = vpop.f32.mrf.mxu0
  %v921 = vadd.f32 %v739, %v920
  %922 = vmatmul.f32.gmra.mxu0 %v811
  %v923 = vpop.f32.mrf.mxu0
  %v924 = vadd.f32 %v739, %v923
  %925 = vmatmul.f32.gmra.mxu0 %v814
  %v926 = vpop.f32.mrf.mxu0
  %v927 = vadd.f32 %v739, %v926
  %928 = vmatmul.f32.gmra.mxu0 %v817
  %v929 = vpop.f32.mrf.mxu0
  %v930 = vadd.f32 %v739, %v929
  %931 = vmatmul.f32.gmra.mxu0 %v820
  %v932 = vpop.f32.mrf.mxu0
  %v933 = vadd.f32 %v739, %v932
  %934 = vmatmul.f32.gmra.mxu0 %v823
  %v935 = vpop.f32.mrf.mxu0
  %v936 = vadd.f32 %v739, %v935
  %937 = vmatmul.f32.gmra.mxu0 %v826
  %v938 = vpop.f32.mrf.mxu0
  %v939 = vadd.f32 %v739, %v938
  %940 = vmatmul.f32.gmra.mxu0 %v829
  %v941 = vpop.f32.mrf.mxu0
  %v942 = vadd.f32 %v739, %v941
  %943 = vmatmul.f32.gmra.mxu0 %v832
  %v944 = vpop.f32.mrf.mxu0
  %v945 = vadd.f32 %v739, %v944
  %946 = vmatmul.f32.gmra.mxu0 %v835
  %v947 = vpop.f32.mrf.mxu0
  %v948 = vadd.f32 %v739, %v947
  %949 = vdwg.mxu0
  %vm950 = vcmask 130048
  %951 = vst.msk [vmem:[%s9] sm:$0xff] %vm950, %v855
  %952 = vst.msk [vmem:[%s9 + $0x8] sm:$0xff] %vm950, %v858
  %953 = vst.msk [vmem:[%s9 + $0x10] sm:$0xff] %vm950, %v861
  %954 = vst.msk [vmem:[%s9 + $0x18] sm:$0xff] %vm950, %v864
  %955 = vst.msk [vmem:[%s9 + $0x20] sm:$0xff] %vm950, %v867
  %956 = vst.msk [vmem:[%s9 + $0x28] sm:$0xff] %vm950, %v870
  %957 = vst.msk [vmem:[%s9 + $0x30] sm:$0xff] %vm950, %v873
  %958 = vst.msk [vmem:[%s9 + $0x38] sm:$0xff] %vm950, %v876
  %959 = vst.msk [vmem:[%s9 + $0x40] sm:$0xff] %vm950, %v879
  %960 = vst.msk [vmem:[%s9 + $0x48] sm:$0xff] %vm950, %v882
  %961 = vst.msk [vmem:[%s9 + $0x50] sm:$0xff] %vm950, %v885
  %962 = vst.msk [vmem:[%s9 + $0x58] sm:$0xff] %vm950, %v888
  %963 = vst.msk [vmem:[%s9 + $0x60] sm:$0xff] %vm950, %v891
  %964 = vst.msk [vmem:[%s9 + $0x68] sm:$0xff] %vm950, %v894
  %965 = vst.msk [vmem:[%s9 + $0x70] sm:$0xff] %vm950, %v897
  %966 = vst.msk [vmem:[%s9 + $0x78] sm:$0xff] %vm950, %v900
  %967 = vst.msk [vmem:[%s9 + $0x80] sm:$0xff] %vm950, %v903
  %968 = vst.msk [vmem:[%s9 + $0x88] sm:$0xff] %vm950, %v906
  %969 = vst.msk [vmem:[%s9 + $0x90] sm:$0xff] %vm950, %v909
  %970 = vst.msk [vmem:[%s9 + $0x98] sm:$0xff] %vm950, %v912
  %971 = vst.msk [vmem:[%s9 + $0xa0] sm:$0xff] %vm950, %v915
  %972 = vst.msk [vmem:[%s9 + $0xa8] sm:$0xff] %vm950, %v918
  %973 = vst.msk [vmem:[%s9 + $0xb0] sm:$0xff] %vm950, %v921
  %974 = vst.msk [vmem:[%s9 + $0xb8] sm:$0xff] %vm950, %v924
  %975 = vst.msk [vmem:[%s9 + $0xc0] sm:$0xff] %vm950, %v927
  %976 = vst.msk [vmem:[%s9 + $0xc8] sm:$0xff] %vm950, %v930
  %977 = vst.msk [vmem:[%s9 + $0xd0] sm:$0xff] %vm950, %v933
  %978 = vst.msk [vmem:[%s9 + $0xd8] sm:$0xff] %vm950, %v936
  %979 = vst.msk [vmem:[%s9 + $0xe0] sm:$0xff] %vm950, %v939
  %980 = vst.msk [vmem:[%s9 + $0xe8] sm:$0xff] %vm950, %v942
  %981 = vst.msk [vmem:[%s9 + $0xf0] sm:$0xff] %vm950, %v945
  %982 = vst.msk [vmem:[%s9 + $0xf8] sm:$0xff] %vm950, %v948
  // Predicated region
  $region38: #{tpu_custom_call.1} parent=0 // pred_check
    _
  $region39: #{tpu_custom_call.1} parent=0 // pred_check_branch
    %984 = sbr.rel (0) target = $region41
  $region40: #{tpu_custom_call.1} parent=0 // pred_region
    _
  $region41: #{tpu_custom_call.1} parent=0 // pred_fallthru
    _
  // Predicated region
  $region42: #{tpu_custom_call.1} parent=0 // pred_check
    _
  $region43: #{tpu_custom_call.1} parent=0 // pred_check_branch
    %986 = sbr.rel (0) target = $region45
  $region44: #{tpu_custom_call.1} parent=0 // pred_region
    _
  $region45: #{tpu_custom_call.1} parent=0 // pred_fallthru
    _

</llo_original>
